<compile_context>
chip_gen: v7x
topology: tpu7x:2x2x1
jax: 0.10.0
libtpu: 0.0.40
codegen_flags: <defaults>
</compile_context>

<pallas_src>
import functools

import jax
import jax.numpy as jnp
from jax.experimental import pallas as pl
from jax.experimental.pallas import tpu as pltpu


def _round_up(a: int, b: int) -> int:
    return ((a + b - 1) // b) * b


def _stats_kernel(x_ref, stats_ref):
    """Accumulate per-(packed)channel sum and sum-of-squares over N tiles.

    x_ref: (TILE_N, Cp) tile of the packed input.
    stats_ref: (2, Cp) f32, resident across the grid (constant index_map);
               row 0 = sum(x), row 1 = sum(x*x).
    """
    @pl.when(pl.program_id(0) == 0)
    def _():
        stats_ref[...] = jnp.zeros_like(stats_ref)

    x = x_ref[...].astype(jnp.float32)
    s = jnp.sum(x, axis=0, keepdims=True)        # (1, Cp)
    sq = jnp.sum(x * x, axis=0, keepdims=True)   # (1, Cp)
    # NOTE: if the stats pass ever turns out XLU-bound, these reductions can be
    # moved to the MXU via jnp.dot(ones((1, TILE_N)), x). Mem-bound here.
    stats_ref[...] += jnp.concatenate([s, sq], axis=0)


def _normalize_kernel(x_ref, scale_ref, bias_ref, o_ref):
    """y = x * scale + bias (scale/bias already fold gamma/beta/mean/inv_std)."""
    x = x_ref[...].astype(jnp.float32)
    o_ref[...] = (x * scale_ref[...] + bias_ref[...]).astype(o_ref.dtype)


def batchnorm_forward(x, gamma, beta, *, eps: float = 1e-5):
    """x: (B, L, C) -> (B, L, C); BatchNorm1d over channel axis C (train mode)."""
    B, L, C = x.shape
    N = B * L
    itemsize = jnp.dtype(x.dtype).itemsize

    # ---- lane-dense packing for narrow channel counts -----------------------
    if C < 128 and 128 % C == 0:
        fold = 128 // C
    else:
        fold = 1
    Cp = fold * C

    x2d = x.reshape(N, C)
    N_f = _round_up(N, fold)
    if N_f != N:
        # zero padding: contributes 0 to sum and sum-of-squares (true N used below)
        x2d = jnp.pad(x2d, ((0, N_f - N), (0, 0)))
    Np = N_f // fold
    xp = x2d.reshape(Np, Cp)

    # ---- row-tile size: big tiles, but keep 4-buffer working set small ------
    tile_n = 1024
    while tile_n > 64 and 4 * tile_n * Cp * itemsize > 8 * 1024 * 1024:
        tile_n //= 2
    tile_n = min(tile_n, _round_up(Np, 8))      # don't over-pad tiny inputs
    Np_pad = _round_up(Np, tile_n)
    if Np_pad != Np:
        xp = jnp.pad(xp, ((0, Np_pad - Np), (0, 0)))
    n_tiles = Np_pad // tile_n

    vmem_limit = 32 * 1024 * 1024  # fits v5e/v6e/v7x scoped budgets comfortably

    # ---- pass 1: per-channel sum / sum-of-squares (accumulator pattern) -----
    stats = pl.pallas_call(
        _stats_kernel,
        out_shape=jax.ShapeDtypeStruct((2, Cp), jnp.float32),
        grid_spec=pltpu.PrefetchScalarGridSpec(
            num_scalar_prefetch=0,
            grid=(n_tiles,),
            in_specs=[pl.BlockSpec((tile_n, Cp), lambda i: (i, 0))],
            out_specs=pl.BlockSpec((2, Cp), lambda i: (0, 0)),
        ),
        compiler_params=pltpu.CompilerParams(
            dimension_semantics=("arbitrary",),
            vmem_limit_bytes=vmem_limit,
        ),
    )(xp)

    # ---- tiny glue: fold lane groups, derive per-channel scale / bias -------
    sums = stats[0]
    ssqs = stats[1]
    if fold > 1:
        sums = sums.reshape(fold, C).sum(axis=0)
        ssqs = ssqs.reshape(fold, C).sum(axis=0)
    inv_n = 1.0 / float(N)
    mean = sums * inv_n
    var = jnp.maximum(ssqs * inv_n - mean * mean, 0.0)   # biased batch variance
    scale = gamma.astype(jnp.float32) * jax.lax.rsqrt(var + eps)   # (C,)
    bias = beta.astype(jnp.float32) - mean * scale                 # (C,)
    scale_p = jnp.tile(scale, fold).reshape(1, Cp)
    bias_p = jnp.tile(bias, fold).reshape(1, Cp)

    # ---- pass 2: elementwise normalize (lane-dense, both TCs on v7x) --------
    out_p = pl.pallas_call(
        _normalize_kernel,
        out_shape=jax.ShapeDtypeStruct((Np_pad, Cp), x.dtype),
        grid_spec=pltpu.PrefetchScalarGridSpec(
            num_scalar_prefetch=0,
            grid=(n_tiles,),
            in_specs=[
                pl.BlockSpec((tile_n, Cp), lambda i: (i, 0)),
                pl.BlockSpec((1, Cp), lambda i: (0, 0)),   # grid-resident
                pl.BlockSpec((1, Cp), lambda i: (0, 0)),   # grid-resident
            ],
            out_specs=pl.BlockSpec((tile_n, Cp), lambda i: (i, 0)),
        ),
        compiler_params=pltpu.CompilerParams(
            dimension_semantics=("parallel",),
            vmem_limit_bytes=vmem_limit,
        ),
    )(xp, scale_p, bias_p)

    out2d = out_p.reshape(Np_pad * fold, C)[:N]
    return out2d.reshape(B, L, C)


if __name__ == "__main__":
    # Shapes implied by the module: x is (batch, seq, num_features).
    B, L, C = 2, 8, 32
    key = jax.random.PRNGKey(0)
    x = jax.random.normal(key, (B, L, C), dtype=jnp.float32)

    # nn.BatchNorm1d default affine init: weight (gamma) = 1, bias (beta) = 0.
    gamma = jnp.ones((C,), dtype=jnp.float32)
    beta = jnp.zeros((C,), dtype=jnp.float32)

    out = batchnorm_forward(x, gamma, beta, eps=1e-5)
    jax.block_until_ready(out)

    # Plain-JAX reference of the same math (training-mode BN forward).
    x32 = x.astype(jnp.float32)
    mean = jnp.mean(x32, axis=(0, 1), keepdims=True)
    var = jnp.mean((x32 - mean) ** 2, axis=(0, 1), keepdims=True)
    ref = (x32 - mean) / jnp.sqrt(var + 1e-5) * gamma + beta
    assert out.shape == (B, L, C)
    assert jnp.max(jnp.abs(out - ref)) < 1e-4

    print("KERNEL_OK")
</pallas_src>

<mosaic_0001>
module attributes {stable_mosaic.version = 11 : i64} {
  func.func @_stats_kernel(%arg0: i32, %arg1: memref<8x128xf32, #tpu.memory_space<vmem>>, %arg2: memref<2x128xf32, #tpu.memory_space<vmem>>) attributes {dimension_semantics = [#tpu.dimension_semantics<arbitrary>], iteration_bounds = array<i64: 1>, scalar_prefetch = 0 : i64, scratch_operands = 0 : i64, tpu.core_type = #tpu.core_type<tc>, window_params = [{transform_indices = @transform_0, window_bounds = array<i64: 8, 128>}, {pipeline_mode = #tpu.pipeline_mode<synchronous>, transform_indices = @transform_1, window_bounds = array<i64: 2, 128>}]} {
    %c0_i32 = arith.constant 0 : i32
    %0 = arith.cmpi eq, %arg0, %c0_i32 : i32
    %1 = arith.extui %0 : i1 to i32
    %c0_i32_0 = arith.constant 0 : i32
    %2 = arith.cmpi ne, %1, %c0_i32_0 : i32
    scf.if %2 {
      %cst_7 = arith.constant 0.000000e+00 : f32
      %13 = vector.broadcast %cst_7 : f32 to vector<2x128xf32>
      %c0_8 = arith.constant 0 : index
      %c0_9 = arith.constant 0 : index
      %14 = vector.load %arg2[%c0_8, %c0_9] : memref<2x128xf32, #tpu.memory_space<vmem>>, vector<2x128xf32>
      tpu.vector_store %arg2[%c0_8, %c0_9], %13 {strides = array<i32>} : memref<2x128xf32, #tpu.memory_space<vmem>>, vector<2x128xf32>,
    } else {
    }
    %c0 = arith.constant 0 : index
    %c0_1 = arith.constant 0 : index
    %3 = vector.load %arg1[%c0, %c0_1] : memref<8x128xf32, #tpu.memory_space<vmem>>, vector<8x128xf32>
    %cst = arith.constant dense<0.000000e+00> : vector<128xf32>
    %4 = vector.multi_reduction <add>, %3, %cst [0] : vector<8x128xf32> to vector<128xf32>
    %5 = vector.shape_cast %4 : vector<128xf32> to vector<1x128xf32>
    %6 = arith.mulf %3, %3 : vector<8x128xf32>
    %cst_2 = arith.constant dense<0.000000e+00> : vector<128xf32>
    %7 = vector.multi_reduction <add>, %6, %cst_2 [0] : vector<8x128xf32> to vector<128xf32>
    %8 = vector.shape_cast %7 : vector<128xf32> to vector<1x128xf32>
    %c0_3 = arith.constant 0 : index
    %c0_4 = arith.constant 0 : index
    %9 = vector.load %arg2[%c0_3, %c0_4] : memref<2x128xf32, #tpu.memory_space<vmem>>, vector<2x128xf32>
    %10 = tpu.concatenate %5, %8 in 0 : vector<1x128xf32>, vector<1x128xf32> -> vector<2x128xf32>
    %11 = arith.addf %9, %10 : vector<2x128xf32>
    %c0_5 = arith.constant 0 : index
    %c0_6 = arith.constant 0 : index
    %12 = vector.load %arg2[%c0_5, %c0_6] : memref<2x128xf32, #tpu.memory_space<vmem>>, vector<2x128xf32>
    tpu.vector_store %arg2[%c0_5, %c0_6], %11 {strides = array<i32>} : memref<2x128xf32, #tpu.memory_space<vmem>>, vector<2x128xf32>,
    return
  }
  func.func @transform_0(%arg0: i32) -> (i32, i32) {
    %c0_i32 = arith.constant 0 : i32
    %c0_i32_0 = arith.constant 0 : i32
    return %arg0, %c0_i32 : i32, i32
  }
  func.func @transform_1(%arg0: i32) -> (i32, i32) {
    %c0_i32 = arith.constant 0 : i32
    %c0_i32_0 = arith.constant 0 : i32
    %c0_i32_1 = arith.constant 0 : i32
    return %c0_i32, %c0_i32_0 : i32, i32
  }
}

</mosaic_0001>

<llo_original>
// kernel: tpu_custom_call.1
$region0: #{tpu_custom_call.1}
  #allocation0 [shape = 'u32[]', space=smem, size = 0x4, offset = 0x4, fixed_abs, tag = 'smem constant byte address 0x4 - core index']
  #allocation1 [shape = 'u32[144,128]{1,0:T(1,128)}', space=vmem, size = 0x12000, scoped, tag = 'internal scratch']
  %s0 = inlined_call_operand.hbm [shape: f32[8,128], index: 0, kind: input, shape index: {}]
  %s1 = inlined_call_operand.hbm [shape: f32[2,128], index: 1, kind: output, shape index: {}]
  %s2 = sld [smem:[#allocation0]]
  $region22: #{tpu_custom_call.1} parent=0
    _
  %s4 = ssub.s32 1, %s2
  %s5 = scalar_select 0, %s4, %s2
  $region1: #{tpu_custom_call.1} parent=0
    #allocation2 [shape = 'u8[4096]{0}', space=vmem, size = 0x1000, scoped, tag = 'input window, operand 0, single buffered']
    #allocation3 [shape = 's32[1]{0}', space=sflag, size = 0x4, scoped, tag = 'scoped memory for tpu_custom_call.1']
    #allocation4 [shape = 's32[1]{0}', space=sflag, size = 0x4, scoped, tag = 'scoped memory for tpu_custom_call.1']
    #allocation5 [shape = 'u8[1024]{0}', space=vmem, size = 0x400, scoped, tag = 'output window, operand 0, single buffered']
    %6 = vsyncpa [#allocation3], 0
    %7 = vsyncpa [#allocation4], 0
    // Predicated region
    $region2: #{tpu_custom_call.1} parent=1 // pred_check
      _
    $region3: #{tpu_custom_call.1} parent=1 // pred_check_branch
      %9 = sbr.rel (0) target = $region5
    $region4: #{tpu_custom_call.1} parent=1 // pred_region
      %s11 = ssub.s32 128, 128
      %12 = vsyncadd [#allocation3], %s11
      %s14 = sshll.u32 [#allocation2], 4
      %s15 = int_to_ptr.vmem [resolvable:$true] %s14
      %17 = dma.hbm_to_vmem [thread:$0]  %s0, 128, %s15, [#allocation3]
    $region5: #{tpu_custom_call.1} parent=1 // pred_fallthru
      _
    // Predicated region
    $region6: #{tpu_custom_call.1} parent=1 // pred_check
      _
    $region7: #{tpu_custom_call.1} parent=1 // pred_check_branch
      %19 = sbr.rel (0) target = $region9
    $region8: #{tpu_custom_call.1} parent=1 // pred_region
      %20 = dma.done [#allocation3], 128
    $region9: #{tpu_custom_call.1} parent=1 // pred_fallthru
      _
    %p21 = scmp.eq.s32.totalorder 0, 0
    // Predicated region
    $region10: #{tpu_custom_call.1} parent=1 // pred_check
      %p22 = pneg %p21
    $region11: #{tpu_custom_call.1} parent=1 // pred_check_branch
      %24 = sbr.rel (%p22) target = $region13
    $region12: #{tpu_custom_call.1} parent=1 // pred_region
      %25 = vst [vmem:[#allocation5] sm:$0x3] 0.0
    $region13: #{tpu_custom_call.1} parent=1 // pred_fallthru
      _
    %v26 = vld [vmem:[#allocation2] sm:$0xff]
    %v27 = vrot.slane %v26, 4
    %v28 = vadd.f32 %v26, %v27
    %v29 = vrot.slane %v28, 2
    %v30 = vadd.f32 %v28, %v29
    %v31 = vrot.slane %v30, 1
    %v32 = vadd.f32 %v30, %v31
    %v33 = vmul.f32 %v26, %v26
    %v34 = vrot.slane %v33, 4
    %v35 = vadd.f32 %v33, %v34
    %v36 = vrot.slane %v35, 2
    %v37 = vadd.f32 %v35, %v36
    %v38 = vrot.slane %v37, 1
    %v39 = vadd.f32 %v37, %v38
    %v40 = vld [vmem:[#allocation5] sm:$0x3]
    %vm41 = vcmask 1040384
    %v42 = vsel %vm41, %v32, %v39
    %v43 = vadd.f32 %v40, %v42
    %44 = vst [vmem:[#allocation5] sm:$0x3] %v43
    // Predicated region
    $region14: #{tpu_custom_call.1} parent=1 // pred_check
      _
    $region15: #{tpu_custom_call.1} parent=1 // pred_check_branch
      %46 = sbr.rel (0) target = $region17
    $region16: #{tpu_custom_call.1} parent=1 // pred_region
      %s48 = ssub.s32 32, 32
      %49 = vsyncadd [#allocation4], %s48
      %s51 = sshll.u32 [#allocation5], 4
      %s52 = int_to_ptr.vmem [resolvable:$true] %s51
      %54 = dma.vmem_to_hbm [thread:$0]  %s52, 32, %s1, [#allocation4]
    $region17: #{tpu_custom_call.1} parent=1 // pred_fallthru
      _
    // Predicated region
    $region18: #{tpu_custom_call.1} parent=1 // pred_check
      _
    $region19: #{tpu_custom_call.1} parent=1 // pred_check_branch
      %56 = sbr.rel (0) target = $region21
    $region20: #{tpu_custom_call.1} parent=1 // pred_region
      %57 = dma.done [#allocation4], 32
    $region21: #{tpu_custom_call.1} parent=1 // pred_fallthru
      _
    %58 = vsyncpa [#allocation3], 1
    %59 = vsyncpa [#allocation4], 1

</llo_original>
